<compile_context>
chip_gen: v6e
topology: v6e:2x2x1
jax: 0.10.0
libtpu: 0.0.40
codegen_flags: <defaults>
</compile_context>

<pallas_src>
import functools

import jax
import jax.numpy as jnp
from jax import lax
from jax.experimental import pallas as pl
from jax.experimental.pallas import tpu as pltpu

_LANE = 128


def _cdiv(a, b):
    return -(-a // b)


def _vmem_config():
    """Per-generation VMEM sizing (v5e/v6e: 128 MiB physical, v7x: 64 MiB)."""
    cap = 64 * 1024 * 1024  # conservative default (v7x-sized)
    try:
        info = pltpu.get_tpu_info()
        cap = int(getattr(info, "vmem_capacity_bytes", cap)) or cap
    except Exception:
        pass
    vmem_limit = min(int(cap * 0.78), 100 * 1024 * 1024)   # explicit scoped limit
    block_budget = min(int(cap * 0.45), 80 * 1024 * 1024)  # live-block footprint
    return block_budget, vmem_limit


def _fc_scale(y_f32, w1_ref, w2_ref):
    """Squeeze->excite MLP: (rows, C) f32 -> sigmoid scale (rows, C) f32.

    Weights stay in their native dtype (native bf16 MXU path on v6e/v7x); the
    tiny pooled activation is cast instead.  Both contractions use dim 1 on
    both sides (torch Linear layout: y @ w.T) — no wrapper-side transposes.
    """
    w1 = w1_ref[...]
    w2 = w2_ref[...]
    z = lax.dot_general(y_f32.astype(w1.dtype), w1,
                        (((1,), (1,)), ((), ())),
                        preferred_element_type=jnp.float32)
    z = jnp.maximum(z, 0.0)
    s = lax.dot_general(z.astype(w2.dtype), w2,
                        (((1,), (1,)), ((), ())),
                        preferred_element_type=jnp.float32)
    return jax.nn.sigmoid(s)


# ---------------- fast path: fused per-batch-block kernel -------------------
def _se_fused_kernel(x_ref, w1_ref, w2_ref, pooled_ref, out_ref, *,
                     inv_hw, hw_chunk):
    # x_ref / out_ref: (b_blk, C, HW).  One HBM read of x: pool + FC + scale.
    y = jnp.sum(x_ref[...], axis=-1, dtype=jnp.float32) * inv_hw   # (b_blk, C)
    pooled_ref[...] = y.astype(pooled_ref.dtype)[:, :, None]
    s = _fc_scale(y, w1_ref, w2_ref).astype(out_ref.dtype)[:, :, None]
    hw = out_ref.shape[-1]
    if hw_chunk >= hw:
        out_ref[...] = x_ref[...] * s
    else:
        # Lane-aligned static chunks bound vreg live ranges on large slabs.
        for lo in range(0, hw, hw_chunk):
            hi = min(lo + hw_chunk, hw)
            out_ref[:, :, lo:hi] = x_ref[:, :, lo:hi] * s


# ---------------- fallback pass 1: streaming pool + tiny FC -----------------
def _se_pool_fc_kernel(x_ref, w1_ref, w2_ref, pooled_ref, s_ref, acc_ref, *,
                       inv_hw, hw, needs_mask):
    # x_ref: (1, C, hw_tile); acc_ref: (1, C, 1) f32 accumulator.
    ki = pl.program_id(1)
    hw_tile = x_ref.shape[-1]

    @pl.when(ki == 0)
    def _():
        acc_ref[...] = jnp.zeros_like(acc_ref)

    xv = x_ref[...]
    if needs_mask:
        # Ragged last HW tile: zero the out-of-bounds lanes so the sum-pool
        # stays exact (cheap VPU filler under an HBM-read-bound pass).
        pos = ki * hw_tile + lax.broadcasted_iota(jnp.int32, xv.shape, 2)
        xv = jnp.where(pos < hw, xv, 0)
    acc_ref[...] += jnp.sum(xv, axis=-1, keepdims=True, dtype=jnp.float32)

    @pl.when(ki == pl.num_programs(1) - 1)
    def _():
        y3 = acc_ref[...] * inv_hw                     # (1, C, 1) f32
        pooled_ref[...] = y3.astype(pooled_ref.dtype)
        s_ref[...] = _fc_scale(y3[:, :, 0], w1_ref, w2_ref)[:, :, None]


# ---------------- fallback pass 2: streaming broadcast scale ----------------
def _se_scale_kernel(x_ref, s_ref, out_ref):
    # x_ref/out_ref: (1, C, hw_tile); s_ref: (1, C, 1) f32.  The ragged last
    # HW tile is handled by Pallas' masked partial stores on the output.
    out_ref[...] = x_ref[...] * s_ref[...].astype(out_ref.dtype)


def se_layer(x, w1, w2, *, vmem_block_budget=None):
    """SELayer forward.

    x:  (B, C, H, W) NCHW input.
    w1: (C_red, C)   torch nn.Linear weight (out, in), bias-free.
    w2: (C, C_red)   torch nn.Linear weight, bias-free.
    Returns (pooled (B, C), out (B, C, H, W)) — matches the PyTorch module.
    """
    b, c, h, w_sp = x.shape
    hw = h * w_sp
    c_red = w1.shape[0]
    assert w1.shape == (c_red, c) and w2.shape == (c, c_red)

    budget, vmem_limit = _vmem_config()
    if vmem_block_budget is None:
        vmem_block_budget = budget

    itemsize = x.dtype.itemsize
    inv_hw = 1.0 / float(hw)
    x_flat = x.reshape(b, c, hw)                       # contiguous merge: free
    row_bytes = c * hw * itemsize                      # one batch row of x
    w_bytes = 2 * 2 * c * c_red * w1.dtype.itemsize    # both weights, dbuf
    compiler_flags = dict(vmem_limit_bytes=vmem_limit)

    # ---- fused fast path: choose a batch block (any divisor of B) ----------
    # Footprint: double-buffered x-in + out slabs (4x) + weights + pooled.
    def footprint(d):
        return 4 * d * row_bytes + w_bytes + 4 * d * c * itemsize

    feasible = [d for d in range(1, b + 1)
                if b % d == 0 and footprint(d) <= vmem_block_budget]
    b_blk = 0
    # Prefer >=8 steps with >=1 MiB slabs, then >=4 steps with >=512 KiB,
    # then anything giving >=2 steps (both v7x TensorCores), then any.
    for steps_req, bytes_req in ((8, 1 << 20), (4, 512 << 10), (2, 0), (1, 0)):
        cands = [d for d in feasible
                 if b // d >= min(b, steps_req) and d * row_bytes >= bytes_req]
        if cands:
            b_blk = max(cands)
            break

    if b_blk:
        blk_bytes = b_blk * row_bytes
        if blk_bytes <= (4 << 20):
            hw_chunk = hw
        else:
            n_chunks = min(16, _cdiv(blk_bytes, 2 << 20))
            hw_chunk = max(_LANE, _cdiv(_cdiv(hw, n_chunks), _LANE) * _LANE)

        kernel = functools.partial(_se_fused_kernel, inv_hw=inv_hw,
                                   hw_chunk=hw_chunk)
        pooled3, out_flat = pl.pallas_call(
            kernel,
            grid=(b // b_blk,),
            in_specs=[
                pl.BlockSpec((b_blk, c, hw), lambda i: (i, 0, 0)),
                pl.BlockSpec((c_red, c), lambda i: (0, 0)),   # VMEM-resident
                pl.BlockSpec((c, c_red), lambda i: (0, 0)),   # VMEM-resident
            ],
            out_specs=(
                pl.BlockSpec((b_blk, c, 1), lambda i: (i, 0, 0)),
                pl.BlockSpec((b_blk, c, hw), lambda i: (i, 0, 0)),
            ),
            out_shape=(
                jax.ShapeDtypeStruct((b, c, 1), x.dtype),
                jax.ShapeDtypeStruct((b, c, hw), x.dtype),
            ),
            compiler_params=pltpu.CompilerParams(
                dimension_semantics=("parallel",), **compiler_flags),
            cost_estimate=pl.CostEstimate(
                flops=2 * b * c * hw + 4 * b * c * c_red,
                transcendentals=b * c,
                bytes_accessed=(2 * b * c * hw * itemsize
                                + 2 * c * c_red * w1.dtype.itemsize)),
        )(x_flat, w1, w2)
        pooled = pooled3.reshape(b, c)
    else:
        # ---- two-phase streaming fallback (bounded VMEM, 1 extra x read) ---
        # HW tile: multiple of 128, targeting ~1-4 MiB per block; the ragged
        # last tile is masked in-kernel (no pad/slice HBM passes).
        tile_budget = max(_LANE * c * itemsize,
                          min(4 << 20, (vmem_block_budget - w_bytes) // 4))
        hw_tile = max(_LANE, (tile_budget // (c * itemsize)) // _LANE * _LANE)
        if hw_tile >= hw:
            hw_tile = hw               # full extent: legal and needs no mask
        n_hw = _cdiv(hw, hw_tile)
        needs_mask = (hw % hw_tile) != 0

        pool_kernel = functools.partial(_se_pool_fc_kernel, inv_hw=inv_hw,
                                        hw=hw, needs_mask=needs_mask)
        pooled3, s3 = pl.pallas_call(
            pool_kernel,
            grid=(b, n_hw),
            in_specs=[
                pl.BlockSpec((1, c, hw_tile), lambda bi, ki: (bi, 0, ki)),
                pl.BlockSpec((c_red, c), lambda bi, ki: (0, 0)),
                pl.BlockSpec((c, c_red), lambda bi, ki: (0, 0)),
            ],
            out_specs=(
                pl.BlockSpec((1, c, 1), lambda bi, ki: (bi, 0, 0)),
                pl.BlockSpec((1, c, 1), lambda bi, ki: (bi, 0, 0)),
            ),
            out_shape=(
                jax.ShapeDtypeStruct((b, c, 1), x.dtype),      # pooled
                jax.ShapeDtypeStruct((b, c, 1), jnp.float32),  # sigmoid scale
            ),
            scratch_shapes=[pltpu.VMEM((1, c, 1), jnp.float32)],
            compiler_params=pltpu.CompilerParams(
                dimension_semantics=("parallel", "arbitrary"), **compiler_flags),
            cost_estimate=pl.CostEstimate(
                flops=b * c * hw + 4 * b * c * c_red,
                transcendentals=b * c,
                bytes_accessed=b * c * hw * itemsize),
        )(x_flat, w1, w2)

        out_flat = pl.pallas_call(
            _se_scale_kernel,
            grid=(b, n_hw),
            in_specs=[
                pl.BlockSpec((1, c, hw_tile), lambda bi, ki: (bi, 0, ki)),
                pl.BlockSpec((1, c, 1), lambda bi, ki: (bi, 0, 0)),
            ],
            out_specs=pl.BlockSpec((1, c, hw_tile), lambda bi, ki: (bi, 0, ki)),
            out_shape=jax.ShapeDtypeStruct((b, c, hw), x.dtype),
            compiler_params=pltpu.CompilerParams(
                dimension_semantics=("parallel", "parallel"), **compiler_flags),
            cost_estimate=pl.CostEstimate(
                flops=b * c * hw,
                transcendentals=0,
                bytes_accessed=2 * b * c * hw * itemsize),
        )(x_flat, s3)

        pooled = pooled3.reshape(b, c)

    return pooled, out_flat.reshape(b, c, h, w_sp)


def _reference(x, w1, w2):
    y = jnp.mean(x, axis=(2, 3))                        # (B, C)
    z = jnp.maximum(y @ w1.T, 0.0)
    s = jax.nn.sigmoid(z @ w2.T)
    return y, x * s[:, :, None, None]


if __name__ == "__main__":
    key = jax.random.PRNGKey(0)
    kx, k1, k2 = jax.random.split(key, 3)

    B, C, H, W = 2, 16, 8, 8
    reduction = 8
    C_red = C // reduction

    x = jax.random.normal(kx, (B, C, H, W), dtype=jnp.float32)
    # torch Linear weight shapes: (out_features, in_features), bias-free.
    w1 = jax.random.normal(k1, (C_red, C), dtype=jnp.float32) * 0.1
    w2 = jax.random.normal(k2, (C, C_red), dtype=jnp.float32) * 0.1

    ref_pooled, ref_out = _reference(x, w1, w2)

    # Fast fused path (per-generation VMEM budget).
    pooled, out = se_layer(x, w1, w2)
    jax.block_until_ready((pooled, out))
    assert jnp.allclose(pooled, ref_pooled, atol=1e-5, rtol=1e-5)
    assert jnp.allclose(out, ref_out, atol=1e-5, rtol=1e-5)

    # Force the bounded-VMEM two-phase streaming path and verify it as well.
    pooled2, out2 = se_layer(x, w1, w2, vmem_block_budget=1)
    jax.block_until_ready((pooled2, out2))
    assert jnp.allclose(pooled2, ref_pooled, atol=1e-5, rtol=1e-5)
    assert jnp.allclose(out2, ref_out, atol=1e-5, rtol=1e-5)

    print("KERNEL_OK")
</pallas_src>

<mosaic_0001>
module attributes {stable_mosaic.version = 11 : i64} {
  func.func @_se_fused_kernel(%arg0: i32, %arg1: memref<1x16x64xf32, #tpu.memory_space<vmem>>, %arg2: memref<2x16xf32, #tpu.memory_space<vmem>>, %arg3: memref<16x2xf32, #tpu.memory_space<vmem>>, %arg4: memref<1x16x1xf32, #tpu.memory_space<vmem>>, %arg5: memref<1x16x64xf32, #tpu.memory_space<vmem>>) attributes {dimension_semantics = [#tpu.dimension_semantics<parallel>], iteration_bounds = array<i64: 2>, scalar_prefetch = 0 : i64, scratch_operands = 0 : i64, tpu.core_type = #tpu.core_type<tc>, window_params = [{transform_indices = @transform_0, window_bounds = array<i64: 1, 16, 64>}, {pipeline_mode = #tpu.pipeline_mode<synchronous>, transform_indices = @transform_1, window_bounds = array<i64: 2, 16>}, {pipeline_mode = #tpu.pipeline_mode<synchronous>, transform_indices = @transform_2, window_bounds = array<i64: 16, 2>}, {transform_indices = @transform_3, window_bounds = array<i64: 1, 16, 1>}, {transform_indices = @transform_4, window_bounds = array<i64: 1, 16, 64>}]} {
    %c0 = arith.constant 0 : index
    %c0_0 = arith.constant 0 : index
    %c0_1 = arith.constant 0 : index
    %0 = vector.load %arg1[%c0, %c0_0, %c0_1] : memref<1x16x64xf32, #tpu.memory_space<vmem>>, vector<1x16x64xf32>
    %cst = arith.constant dense<0.000000e+00> : vector<1x16xf32>
    %1 = vector.multi_reduction <add>, %0, %cst [2] : vector<1x16x64xf32> to vector<1x16xf32>
    %cst_2 = arith.constant 1.562500e-02 : f32
    %2 = vector.broadcast %cst_2 : f32 to vector<1x16xf32>
    %3 = arith.mulf %1, %2 : vector<1x16xf32>
    %4 = vector.shape_cast %3 : vector<1x16xf32> to vector<1x16x1xf32>
    %c0_3 = arith.constant 0 : index
    %c0_4 = arith.constant 0 : index
    %c0_5 = arith.constant 0 : index
    %5 = vector.load %arg4[%c0_3, %c0_4, %c0_5] : memref<1x16x1xf32, #tpu.memory_space<vmem>>, vector<1x16x1xf32>
    tpu.vector_store %arg4[%c0_3, %c0_4, %c0_5], %4 {strides = array<i32>} : memref<1x16x1xf32, #tpu.memory_space<vmem>>, vector<1x16x1xf32>,
    %c0_6 = arith.constant 0 : index
    %c0_7 = arith.constant 0 : index
    %6 = vector.load %arg2[%c0_6, %c0_7] : memref<2x16xf32, #tpu.memory_space<vmem>>, vector<2x16xf32>
    %c0_8 = arith.constant 0 : index
    %c0_9 = arith.constant 0 : index
    %7 = vector.load %arg3[%c0_8, %c0_9] : memref<16x2xf32, #tpu.memory_space<vmem>>, vector<16x2xf32>
    %cst_10 = arith.constant dense<0.000000e+00> : vector<1x2xf32>
    %8 = tpu.matmul %3, %6, %cst_10 {dimension_numbers = #tpu.dot_dimension_numbers<[1], [1], [0], [0], [0, 0, 1, 0], [], []>} : vector<1x16xf32>, vector<2x16xf32>, vector<1x2xf32> -> vector<1x2xf32>
    %cst_11 = arith.constant 0.000000e+00 : f32
    %9 = vector.broadcast %cst_11 : f32 to vector<1x2xf32>
    %10 = arith.maximumf %8, %9 : vector<1x2xf32>
    %cst_12 = arith.constant dense<0.000000e+00> : vector<1x16xf32>
    %11 = tpu.matmul %10, %7, %cst_12 {dimension_numbers = #tpu.dot_dimension_numbers<[1], [1], [0], [0], [0, 0, 1, 0], [], []>} : vector<1x2xf32>, vector<16x2xf32>, vector<1x16xf32> -> vector<1x16xf32>
    %12 = arith.negf %11 : vector<1x16xf32>
    %13 = math.exp %12 : vector<1x16xf32>
    %cst_13 = arith.constant 1.000000e+00 : f32
    %14 = vector.broadcast %cst_13 : f32 to vector<1x16xf32>
    %15 = arith.addf %14, %13 : vector<1x16xf32>
    %16 = arith.divf %14, %15 : vector<1x16xf32>
    %17 = vector.shape_cast %16 : vector<1x16xf32> to vector<1x16x1xf32>
    %c0_14 = arith.constant 0 : index
    %c0_15 = arith.constant 0 : index
    %c0_16 = arith.constant 0 : index
    %18 = vector.load %arg1[%c0_14, %c0_15, %c0_16] : memref<1x16x64xf32, #tpu.memory_space<vmem>>, vector<1x16x64xf32>
    %19 = vector.broadcast %17 : vector<1x16x1xf32> to vector<1x16x64xf32>
    %20 = arith.mulf %18, %19 : vector<1x16x64xf32>
    %c0_17 = arith.constant 0 : index
    %c0_18 = arith.constant 0 : index
    %c0_19 = arith.constant 0 : index
    %21 = vector.load %arg5[%c0_17, %c0_18, %c0_19] : memref<1x16x64xf32, #tpu.memory_space<vmem>>, vector<1x16x64xf32>
    tpu.vector_store %arg5[%c0_17, %c0_18, %c0_19], %20 {strides = array<i32>} : memref<1x16x64xf32, #tpu.memory_space<vmem>>, vector<1x16x64xf32>,
    return
  }
  func.func @transform_0(%arg0: i32) -> (i32, i32, i32) {
    %c0_i32 = arith.constant 0 : i32
    %c0_i32_0 = arith.constant 0 : i32
    %c0_i32_1 = arith.constant 0 : i32
    return %arg0, %c0_i32, %c0_i32_0 : i32, i32, i32
  }
  func.func @transform_1(%arg0: i32) -> (i32, i32) {
    %c0_i32 = arith.constant 0 : i32
    %c0_i32_0 = arith.constant 0 : i32
    %c0_i32_1 = arith.constant 0 : i32
    return %c0_i32, %c0_i32_0 : i32, i32
  }
  func.func @transform_2(%arg0: i32) -> (i32, i32) {
    %c0_i32 = arith.constant 0 : i32
    %c0_i32_0 = arith.constant 0 : i32
    %c0_i32_1 = arith.constant 0 : i32
    return %c0_i32, %c0_i32_0 : i32, i32
  }
  func.func @transform_3(%arg0: i32) -> (i32, i32, i32) {
    %c0_i32 = arith.constant 0 : i32
    %c0_i32_0 = arith.constant 0 : i32
    %c0_i32_1 = arith.constant 0 : i32
    return %arg0, %c0_i32, %c0_i32_0 : i32, i32, i32
  }
  func.func @transform_4(%arg0: i32) -> (i32, i32, i32) {
    %c0_i32 = arith.constant 0 : i32
    %c0_i32_0 = arith.constant 0 : i32
    %c0_i32_1 = arith.constant 0 : i32
    return %arg0, %c0_i32, %c0_i32_0 : i32, i32, i32
  }
}

</mosaic_0001>

<llo_original>
// kernel: tpu_custom_call.1
$region0: #{tpu_custom_call.1}
  #allocation0 [shape = 'u32[]', space=smem, size = 0x4, offset = 0x4, fixed_abs, tag = 'smem constant byte address 0x4 - core index']
  #allocation1 [shape = 'u32[144,128]{1,0:T(1,128)}', space=vmem, size = 0x12000, scoped, tag = 'internal scratch']
  %s0 = inlined_call_operand.hbm [shape: f32[2,16,64], index: 0, kind: input, shape index: {}]
  %s1 = inlined_call_operand.vmem [shape: f32[2,16], index: 1, kind: input, shape index: {}]
  %s2 = inlined_call_operand.vmem [shape: f32[16,2], index: 2, kind: input, shape index: {}]
  %s3 = inlined_call_operand.vmem [shape: f32[2,16,1], index: 3, kind: output, shape index: {0}]
  %s4 = inlined_call_operand.hbm [shape: f32[2,16,64], index: 4, kind: output, shape index: {1}]
  %5 = xla_tuple %s3, %s4
  %s6 = sld [smem:[#allocation0]]
  $region57: #{tpu_custom_call.1} parent=0
    _
  %s8 = ssub.s32 1, %s6
  %s9 = scalar_select 0, %s8, %s6
  $region1: #{tpu_custom_call.1} parent=0
    #allocation2 [shape = 'u8[16384]{0}', space=vmem, size = 0x4000, scoped, tag = 'input window, operand 0']
    #allocation3 [shape = 's32[2]{0}', space=sflag, size = 0x8, scoped, tag = 'scoped memory for tpu_custom_call.1']
    #allocation4 [shape = 's32[2]{0}', space=sflag, size = 0x8, scoped, tag = 'scoped memory for tpu_custom_call.1']
    #allocation5 [shape = 'u8[16384]{0}', space=vmem, size = 0x4000, scoped, tag = 'output window, operand 1']
    %10 = vsyncpa [#allocation3], 0
    %s11 = scalar_lea.sflag [#allocation3], 1
    %12 = vsyncpa %s11, 0
    %13 = vsyncpa [#allocation4], 0
    %s14 = scalar_lea.sflag [#allocation4], 1
    %15 = vsyncpa %s14, 0
    loop: start=0, step=1, limit=4
    $region2: #{tpu_custom_call.1} parent=1 // loop_pre_header
      _
    $region3: #{tpu_custom_call.1} parent=1 // loop_header
      %s17 = sphi 0, %s21
      %p18 = scmp.ge.s32.totalorder %s17, 4
      %s27 = sphi 0, %s29
      %s30 = sphi 0, %s27
      %s31 = sphi 0, %s30
      %s47 = sphi 0, %s31
      %s51 = sphi 0, %s51
      %s53 = sphi 0, %s51
      %s54 = sphi 0, %s53
      %s68 = sphi 0, %s54
      %s72 = sphi 0, %s72
      %s74 = sphi 0, %s72
      %s75 = sphi 0, %s74
      %s89 = sphi 0, %s75
      %s95 = sphi 0, %s97
      %s98 = sphi 0, %s95
      %s99 = sphi 0, %s98
      %s115 = sphi 0, %s99
      %s121 = sphi 0, %s123
      %s124 = sphi 0, %s121
      %s125 = sphi 0, %s124
      %s141 = sphi 0, %s125
    $region4: #{tpu_custom_call.1} parent=1 // loop_header_branch
      %20 = sbr.rel (%p18) target = $region8
    $region5: #{tpu_custom_call.1} parent=1 // loop_body
      %s22 = ssub.s32 %s17, 1
      %s23 = ssub.s32 %s17, 2
      %s24 = sadd.s32 %s17, 1
      %s25 = ssub.s32 %s17, %s24
      %p26 = scmp.eq.s32.totalorder %s25, 0
      %s28 = sadd.s32 %s27, 1
      %s29 = scalar_select %p26, %s27, %s28
      %p32 = pneg %p26
      %p33 = scmp.eq.s32.totalorder %s17, 1
      %p34 = por %p32, %p33
      %p35 = scmp.ne.s32.totalorder %s27, %s30
      %p36 = scmp.eq.s32.totalorder %s17, 0
      %p37 = por %p35, %p36
      %p38 = scmp.ne.s32.totalorder %s27, %s30
      %p39 = scmp.eq.s32.totalorder %s22, 1
      %p40 = por %p38, %p39
      %p41 = scmp.ne.s32.totalorder %s30, %s31
      %p42 = scmp.eq.s32.totalorder %s22, 0
      %p43 = por %p41, %p42
      %p44 = scmp.ne.s32.totalorder %s30, %s31
      %p45 = scmp.eq.s32.totalorder %s23, 1
      %p46 = por %p44, %p45
      %p48 = scmp.ne.s32.totalorder %s31, %s47
      %p49 = scmp.eq.s32.totalorder %s23, 0
      %p50 = por %p48, %p49
      %s52 = sadd.s32 %s51, 1
      %p55 = scmp.eq.s32.totalorder %s17, 1
      %p56 = scmp.ne.s32.totalorder %s51, %s53
      %p57 = scmp.eq.s32.totalorder %s17, 0
      %p58 = por %p56, %p57
      %p59 = scmp.ne.s32.totalorder %s51, %s53
      %p60 = scmp.eq.s32.totalorder %s22, 1
      %p61 = por %p59, %p60
      %p62 = scmp.ne.s32.totalorder %s53, %s54
      %p63 = scmp.eq.s32.totalorder %s22, 0
      %p64 = por %p62, %p63
      %p65 = scmp.ne.s32.totalorder %s53, %s54
      %p66 = scmp.eq.s32.totalorder %s23, 1
      %p67 = por %p65, %p66
      %p69 = scmp.ne.s32.totalorder %s54, %s68
      %p70 = scmp.eq.s32.totalorder %s23, 0
      %p71 = por %p69, %p70
      %s73 = sadd.s32 %s72, 1
      %p76 = scmp.eq.s32.totalorder %s17, 1
      %p77 = scmp.ne.s32.totalorder %s72, %s74
      %p78 = scmp.eq.s32.totalorder %s17, 0
      %p79 = por %p77, %p78
      %p80 = scmp.ne.s32.totalorder %s72, %s74
      %p81 = scmp.eq.s32.totalorder %s22, 1
      %p82 = por %p80, %p81
      %p83 = scmp.ne.s32.totalorder %s74, %s75
      %p84 = scmp.eq.s32.totalorder %s22, 0
      %p85 = por %p83, %p84
      %p86 = scmp.ne.s32.totalorder %s74, %s75
      %p87 = scmp.eq.s32.totalorder %s23, 1
      %p88 = por %p86, %p87
      %p90 = scmp.ne.s32.totalorder %s75, %s89
      %p91 = scmp.eq.s32.totalorder %s23, 0
      %p92 = por %p90, %p91
      %s93 = ssub.s32 %s17, %s24
      %p94 = scmp.eq.s32.totalorder %s93, 0
      %s96 = sadd.s32 %s95, 1
      %s97 = scalar_select %p94, %s95, %s96
      %p100 = pneg %p94
      %p101 = scmp.eq.s32.totalorder %s17, 1
      %p102 = por %p100, %p101
      %p103 = scmp.ne.s32.totalorder %s95, %s98
      %p104 = scmp.eq.s32.totalorder %s17, 0
      %p105 = por %p103, %p104
      %p106 = scmp.ne.s32.totalorder %s95, %s98
      %p107 = scmp.eq.s32.totalorder %s22, 1
      %p108 = por %p106, %p107
      %p109 = scmp.ne.s32.totalorder %s98, %s99
      %p110 = scmp.eq.s32.totalorder %s22, 0
      %p111 = por %p109, %p110
      %p112 = scmp.ne.s32.totalorder %s98, %s99
      %p113 = scmp.eq.s32.totalorder %s23, 1
      %p114 = por %p112, %p113
      %p116 = scmp.ne.s32.totalorder %s99, %s115
      %p117 = scmp.eq.s32.totalorder %s23, 0
      %p118 = por %p116, %p117
      %s119 = ssub.s32 %s17, %s24
      %p120 = scmp.eq.s32.totalorder %s119, 0
      %s122 = sadd.s32 %s121, 1
      %s123 = scalar_select %p120, %s121, %s122
      %p126 = pneg %p120
      %p127 = scmp.eq.s32.totalorder %s17, 1
      %p128 = por %p126, %p127
      %p129 = scmp.ne.s32.totalorder %s121, %s124
      %p130 = scmp.eq.s32.totalorder %s17, 0
      %p131 = por %p129, %p130
      %p132 = scmp.ne.s32.totalorder %s121, %s124
      %p133 = scmp.eq.s32.totalorder %s22, 1
      %p134 = por %p132, %p133
      %p135 = scmp.ne.s32.totalorder %s124, %s125
      %p136 = scmp.eq.s32.totalorder %s22, 0
      %p137 = por %p135, %p136
      %p138 = scmp.ne.s32.totalorder %s124, %s125
      %p139 = scmp.eq.s32.totalorder %s23, 1
      %p140 = por %p138, %p139
      %p142 = scmp.ne.s32.totalorder %s125, %s141
      %p143 = scmp.eq.s32.totalorder %s23, 0
      %p144 = por %p142, %p143
      %p145 = scmp.le.s32.totalorder 1, %s17
      %p146 = scmp.lt.s32.totalorder %s17, 3
      %p147 = pnand %p145, %p146
      %p148 = pneg %p147
      // Predicated region
      $region9: #{tpu_custom_call.1} parent=5 // pred_check
        _
      $region10: #{tpu_custom_call.1} parent=5 // pred_check_branch
        %150 = sbr.rel (%p147) target = $region12
      $region11: #{tpu_custom_call.1} parent=5 // pred_region
        %s151 = ssub.s32 %s17, 1
        // Predicated region
        $region13: #{tpu_custom_call.1} parent=11 // pred_check
          %p152 = pneg %p64
        $region14: #{tpu_custom_call.1} parent=11 // pred_check_branch
          %154 = sbr.rel (%p152) target = $region16
        $region15: #{tpu_custom_call.1} parent=11 // pred_region
          _
        $region16: #{tpu_custom_call.1} parent=11 // pred_fallthru
          _
        // Predicated region
        $region17: #{tpu_custom_call.1} parent=11 // pred_check
          %p155 = pneg %p85
        $region18: #{tpu_custom_call.1} parent=11 // pred_check_branch
          %157 = sbr.rel (%p155) target = $region20
        $region19: #{tpu_custom_call.1} parent=11 // pred_region
          _
        $region20: #{tpu_custom_call.1} parent=11 // pred_fallthru
          _
      $region12: #{tpu_custom_call.1} parent=5 // pred_fallthru
        _
      %p158 = scmp.lt.s32.totalorder %s17, 2
      // Predicated region
      $region21: #{tpu_custom_call.1} parent=5 // pred_check
        %p159 = pneg %p158
      $region22: #{tpu_custom_call.1} parent=5 // pred_check_branch
        %161 = sbr.rel (%p159) target = $region24
      $region23: #{tpu_custom_call.1} parent=5 // pred_region
        // Predicated region
        $region25: #{tpu_custom_call.1} parent=23 // pred_check
          %p162 = pneg %p37
        $region26: #{tpu_custom_call.1} parent=23 // pred_check_branch
          %164 = sbr.rel (%p162) target = $region28
        $region27: #{tpu_custom_call.1} parent=23 // pred_region
          %s165 = sand.u32 %s27, 1
          %s166 = scalar_lea.sflag [#allocation3], %s165
          %s167 = sand.u32 %s27, 1
          %s168 = smul.addr %s167, 16
          %s169 = scalar_lea.vmem [#allocation2], %s168
          %s171 = ssub.s32 256, 256
          %172 = vsyncadd %s166, %s171
          %s173 = smul.addr %s17, 2
          %s174 = smul.addr %s173, 128
          %s175 = scalar_lea.hbm %s0, %s174
          %s176 = sshll.u32 %s169, 4
          %s177 = int_to_ptr.vmem [resolvable:$true] %s176
          %182 = dma.hbm_to_vmem [thread:$0]  %s175, 256, %s177, %s166, 128, 128, 8
        $region28: #{tpu_custom_call.1} parent=23 // pred_fallthru
          _
      $region24: #{tpu_custom_call.1} parent=5 // pred_fallthru
        _
      %p183 = scmp.le.s32.totalorder 1, %s17
      %p184 = scmp.lt.s32.totalorder %s17, 3
      %p185 = pnand %p183, %p184
      %p186 = pneg %p185
      // Predicated region
      $region29: #{tpu_custom_call.1} parent=5 // pred_check
        _
      $region30: #{tpu_custom_call.1} parent=5 // pred_check_branch
        %188 = sbr.rel (%p185) target = $region32
      $region31: #{tpu_custom_call.1} parent=5 // pred_region
        %s189 = ssub.s32 %s17, 1
        %s190 = sand.u32 %s30, 1
        %s191 = scalar_lea.sflag [#allocation3], %s190
        %s192 = sand.u32 %s30, 1
        %s193 = smul.addr %s192, 16
        %s194 = scalar_lea.vmem [#allocation2], %s193
        // Predicated region
        $region33: #{tpu_custom_call.1} parent=31 // pred_check
          %p195 = pneg %p43
        $region34: #{tpu_custom_call.1} parent=31 // pred_check_branch
          %197 = sbr.rel (%p195) target = $region36
        $region35: #{tpu_custom_call.1} parent=31 // pred_region
          %198 = dma.done %s191, 256
        $region36: #{tpu_custom_call.1} parent=31 // pred_fallthru
          _
        %s199 = sand.u32 %s30, 1
        %s200 = scalar_lea.sflag [#allocation3], %s199
        %s201 = sand.u32 %s30, 1
        %s202 = smul.addr %s201, 16
        %s203 = scalar_lea.vmem [#allocation2], %s202
        %p204 = pneg %p43
        %p205 = pneg %p40
        %p206 = pneg %p64
        %p207 = pneg %p61
        %p208 = pneg %p85
        %p209 = pneg %p82
        %p210 = pneg %p111
        %p211 = pneg %p108
        %p212 = scmp.lt.s32.totalorder %s22, 1
        %s213 = scalar_select %p212, %s22, 1
        %s214 = smul.addr %s213, 2
        %s215 = smul.addr %s214, 8
        %s216 = scalar_lea.vmem %s3, %s215
        %p217 = pneg %p137
        %p218 = pneg %p134
        %s219 = sand.u32 %s124, 1
        %s220 = scalar_lea.sflag [#allocation4], %s219
        %s221 = sand.u32 %s124, 1
        %s222 = smul.addr %s221, 16
        %s223 = scalar_lea.vmem [#allocation5], %s222
        %p224 = scmp.lt.s32.totalorder %s22, 1
        %s225 = scalar_select %p224, %s22, 1
        %s226 = smul.addr %s225, 2
        %s227 = smul.addr %s226, 8
        %s228 = scalar_lea.vmem %s3, %s227
        %v229 = vld [vmem:[%s194] sm:$0xff]
        %v230 = vld [vmem:[%s194 + $0x8] sm:$0xff]
        %vm231 = vcmask 523264
        %v232 = vsel %vm231, %v229, 0.0
        %233 = vadd.xlane.f32.xlu0 %v232
        %v234 = vpop.xlane.xlu0 %233
        %v235 = vsel %vm231, %v230, 0.0
        %236 = vadd.xlane.f32.xlu0 %v235
        %v237 = vpop.xlane.xlu0 %236
        %v238 = vmul.f32 %v234, 0.015625
        %v239 = vmul.f32 %v237, 0.015625
        %vm240 = vcmask 7168
        %241 = vst.msk [vmem:[%s228] sm:$0xff] %vm240, %v238
        %242 = vst.msk [vmem:[%s228 + $0x8] sm:$0xff] %vm240, %v239
        %v243 = vld [vmem:[%s1] sm:$0x3]
        %v244 = vld [vmem:[%s2] sm:$0xff]
        %v245 = vld [vmem:[%s2 + $0x8] sm:$0xff]
        %v248 = vlaneseq
        %v249 = vand.u32 %v248, 127
        %v250 = vlaneseq
        %v251 = vshrl.u32 %v250, 7
        %v252 = vsub.s32 %v249, %v251
        %v253 = vrot.slane %v238, %v252
        %v254 = vadd.s32 %v249, 4294967288
        %v255 = vlaneseq
        %v256 = vshrl.u32 %v255, 7
        %v257 = vsub.s32 %v254, %v256
        %v258 = vrot.slane %v239, %v257
        %vm259 = vcmask 130112
        %v260 = vsel %vm259, %v258, %v253
        %vm261 = vcmask 130048
        %v262 = vsel %vm261, %v260, 0
        %v265 = vsel %vm261, %v243, 0
        %267 = vmatprep.subr.mxu0 0.0
        %268 = vmatpush1.xpose.msra.mxu0 0.0
        %269 = vmatprep.subr.mxu0 0.0
        %270 = vmatpush1.xpose.msra.mxu0 0.0
        %271 = vmatprep.subr.mxu0 0.0
        %272 = vmatpush1.xpose.msra.mxu0 0.0
        %273 = vmatprep.subr.mxu0 0.0
        %274 = vmatpush1.xpose.msra.mxu0 0.0
        %275 = vmatprep.subr.mxu0 0.0
        %276 = vmatpush1.xpose.msra.mxu0 0.0
        %277 = vmatprep.subr.mxu0 0.0
        %278 = vmatpush1.xpose.msra.mxu0 0.0
        %279 = vmatprep.subr.mxu0 0.0
        %280 = vmatpush1.xpose.msra.mxu0 0.0
        %281 = vmatprep.subr.mxu0 0.0
        %282 = vmatpush1.xpose.msra.mxu0 0.0
        %283 = vmatprep.subr.mxu0 0.0
        %284 = vmatpush1.xpose.msra.mxu0 0.0
        %285 = vmatprep.subr.mxu0 0.0
        %286 = vmatpush1.xpose.msra.mxu0 0.0
        %287 = vmatprep.subr.mxu0 0.0
        %288 = vmatpush1.xpose.msra.mxu0 0.0
        %289 = vmatprep.subr.mxu0 0.0
        %290 = vmatpush1.xpose.msra.mxu0 0.0
        %291 = vmatprep.subr.mxu0 0.0
        %292 = vmatpush1.xpose.msra.mxu0 0.0
        %293 = vmatprep.subr.mxu0 0.0
        %294 = vmatpush1.xpose.msra.mxu0 0.0
        %295 = vmatprep.subr.mxu0 0.0
        %296 = vmatpush1.xpose.msra.mxu0 0.0
        %297 = vmatprep.subr.mxu0 0.0
        %298 = vmatpush1.xpose.msra.mxu0 %v265
        %299 = vmatprep.subr.mxu0 0.0
        %300 = vmatpush2.xpose.msra.mxu0 0.0
        %301 = vmatprep.subr.mxu0 0.0
        %302 = vmatpush2.xpose.msra.mxu0 0.0
        %303 = vmatprep.subr.mxu0 0.0
        %304 = vmatpush2.xpose.msra.mxu0 0.0
        %305 = vmatprep.subr.mxu0 0.0
        %306 = vmatpush2.xpose.msra.mxu0 0.0
        %307 = vmatprep.subr.mxu0 0.0
        %308 = vmatpush2.xpose.msra.mxu0 0.0
        %309 = vmatprep.subr.mxu0 0.0
        %310 = vmatpush2.xpose.msra.mxu0 0.0
        %311 = vmatprep.subr.mxu0 0.0
        %312 = vmatpush2.xpose.msra.mxu0 0.0
        %313 = vmatprep.subr.mxu0 0.0
        %314 = vmatpush2.xpose.msra.mxu0 0.0
        %315 = vmatprep.subr.mxu0 0.0
        %316 = vmatpush2.xpose.msra.mxu0 0.0
        %317 = vmatprep.subr.mxu0 0.0
        %318 = vmatpush2.xpose.msra.mxu0 0.0
        %319 = vmatprep.subr.mxu0 0.0
        %320 = vmatpush2.xpose.msra.mxu0 0.0
        %321 = vmatprep.subr.mxu0 0.0
        %322 = vmatpush2.xpose.msra.mxu0 0.0
        %323 = vmatprep.subr.mxu0 0.0
        %324 = vmatpush2.xpose.msra.mxu0 0.0
        %325 = vmatprep.subr.mxu0 0.0
        %326 = vmatpush2.xpose.msra.mxu0 0.0
        %327 = vmatprep.subr.mxu0 0.0
        %328 = vmatpush2.xpose.msra.mxu0 0.0
        %329 = vmatprep.subr.mxu0 0.0
        %330 = vmatpush2.xpose.msra.mxu0 0.0
        %331 = vmatprep.mubr.f32.mxu0 0.0
        %332 = vmatmul.mubr.f32.gmra.mxu0 %v262
        %v333 = vpop.f32.mrf.mxu0
        %v334 = vadd.f32 0.0, %v333
        %v335 = vpop.f32.mrf.mxu0
        %336 = vdwg.mxu0
        %v337 = vmax.f32 %v334, 0.0
        %vm338 = vcmask 15360
        %v340 = vsel %vm338, %v337, 0
        %v343 = vsel %vm338, %v244, 0
        %v346 = vsel %vm338, %v245, 0
        %348 = vmatprep.subr.mxu0 0.0
        %349 = vmatpush1.xpose.msra.mxu0 0.0
        %350 = vmatprep.subr.mxu0 0.0
        %351 = vmatpush1.xpose.msra.mxu0 0.0
        %352 = vmatprep.subr.mxu0 0.0
        %353 = vmatpush1.xpose.msra.mxu0 0.0
        %354 = vmatprep.subr.mxu0 0.0
        %355 = vmatpush1.xpose.msra.mxu0 0.0
        %356 = vmatprep.subr.mxu0 0.0
        %357 = vmatpush1.xpose.msra.mxu0 0.0
        %358 = vmatprep.subr.mxu0 0.0
        %359 = vmatpush1.xpose.msra.mxu0 0.0
        %360 = vmatprep.subr.mxu0 0.0
        %361 = vmatpush1.xpose.msra.mxu0 0.0
        %362 = vmatprep.subr.mxu0 0.0
        %363 = vmatpush1.xpose.msra.mxu0 0.0
        %364 = vmatprep.subr.mxu0 0.0
        %365 = vmatpush1.xpose.msra.mxu0 0.0
        %366 = vmatprep.subr.mxu0 0.0
        %367 = vmatpush1.xpose.msra.mxu0 0.0
        %368 = vmatprep.subr.mxu0 0.0
        %369 = vmatpush1.xpose.msra.mxu0 0.0
        %370 = vmatprep.subr.mxu0 0.0
        %371 = vmatpush1.xpose.msra.mxu0 0.0
        %372 = vmatprep.subr.mxu0 0.0
        %373 = vmatpush1.xpose.msra.mxu0 0.0
        %374 = vmatprep.subr.mxu0 0.0
        %375 = vmatpush1.xpose.msra.mxu0 0.0
        %376 = vmatprep.subr.mxu0 0.0
        %377 = vmatpush1.xpose.msra.mxu0 %v346
        %378 = vmatprep.subr.mxu0 0.0
        %379 = vmatpush1.xpose.msra.mxu0 %v343
        %380 = vmatprep.subr.mxu0 0.0
        %381 = vmatpush2.xpose.msra.mxu0 0.0
        %382 = vmatprep.subr.mxu0 0.0
        %383 = vmatpush2.xpose.msra.mxu0 0.0
        %384 = vmatprep.subr.mxu0 0.0
        %385 = vmatpush2.xpose.msra.mxu0 0.0
        %386 = vmatprep.subr.mxu0 0.0
        %387 = vmatpush2.xpose.msra.mxu0 0.0
        %388 = vmatprep.subr.mxu0 0.0
        %389 = vmatpush2.xpose.msra.mxu0 0.0
        %390 = vmatprep.subr.mxu0 0.0
        %391 = vmatpush2.xpose.msra.mxu0 0.0
        %392 = vmatprep.subr.mxu0 0.0
        %393 = vmatpush2.xpose.msra.mxu0 0.0
        %394 = vmatprep.subr.mxu0 0.0
        %395 = vmatpush2.xpose.msra.mxu0 0.0
        %396 = vmatprep.subr.mxu0 0.0
        %397 = vmatpush2.xpose.msra.mxu0 0.0
        %398 = vmatprep.subr.mxu0 0.0
        %399 = vmatpush2.xpose.msra.mxu0 0.0
        %400 = vmatprep.subr.mxu0 0.0
        %401 = vmatpush2.xpose.msra.mxu0 0.0
        %402 = vmatprep.subr.mxu0 0.0
        %403 = vmatpush2.xpose.msra.mxu0 0.0
        %404 = vmatprep.subr.mxu0 0.0
        %405 = vmatpush2.xpose.msra.mxu0 0.0
        %406 = vmatprep.subr.mxu0 0.0
        %407 = vmatpush2.xpose.msra.mxu0 0.0
        %408 = vmatprep.subr.mxu0 0.0
        %409 = vmatpush2.xpose.msra.mxu0 0.0
        %410 = vmatprep.subr.mxu0 0.0
        %411 = vmatpush2.xpose.msra.mxu0 0.0
        %412 = vmatprep.mubr.f32.mxu0 0.0
        %413 = vmatmul.mubr.f32.gmra.mxu0 %v340
        %v414 = vpop.f32.mrf.mxu0
        %v415 = vadd.f32 0.0, %v414
        %v416 = vpop.f32.mrf.mxu0
        %417 = vdwg.mxu0
        %v418 = vxor.u32 %v415, 2147483648
        %v419 = vmul.f32 %v418, 1.442695
        %v420 = vpow.pop %v419
        %v421 = vadd.f32 %v420, 1.0
        %v422 = vrcp.pop %v421
        %v423 = vmul.f32 1.0, %v422
        %v424 = vlaneseq
        %v425 = vshrl.u32 %v424, 7
        %v426 = vsub.s32 0, %v425
        %v427 = vrot.slane %v423, %v426
        %429 = vbcast.lane.b32.xlu0 %v427, 256
        %v430 = vpop.permute.xlu0 %429
        %s432 = sor.u32 256, 8
        %433 = vbcast.lane.b32.xlu0 %v427, %s432
        %v434 = vpop.permute.xlu0 %433
        %v435 = vld [vmem:[%s194] sm:$0xff]
        %v436 = vld [vmem:[%s194 + $0x8] sm:$0xff]
        %v437 = vmul.f32 %v435, %v430
        %v438 = vmul.f32 %v436, %v434
        %439 = vst.msk [vmem:[%s223] sm:$0xff] %vm231, %v437
        %440 = vst.msk [vmem:[%s223 + $0x8] sm:$0xff] %vm231, %v438
        %p441 = scmp.lt.s32.totalorder %s22, 1
        %s442 = scalar_select %p441, %s22, 1
        %s443 = smul.addr %s442, 2
        %s444 = smul.addr %s443, 8
        %s445 = scalar_lea.vmem %s3, %s444
        %s446 = sand.u32 %s124, 1
        %s447 = scalar_lea.sflag [#allocation4], %s446
        %s448 = sand.u32 %s124, 1
        %s449 = smul.addr %s448, 16
        %s450 = scalar_lea.vmem [#allocation5], %s449
        // Predicated region
        $region37: #{tpu_custom_call.1} parent=31 // pred_check
          %p451 = pneg %p108
        $region38: #{tpu_custom_call.1} parent=31 // pred_check_branch
          %453 = sbr.rel (%p451) target = $region40
        $region39: #{tpu_custom_call.1} parent=31 // pred_region
          _
        $region40: #{tpu_custom_call.1} parent=31 // pred_fallthru
          _
        // Predicated region
        $region41: #{tpu_custom_call.1} parent=31 // pred_check
          %p454 = pneg %p134
        $region42: #{tpu_custom_call.1} parent=31 // pred_check_branch
          %456 = sbr.rel (%p454) target = $region44
        $region43: #{tpu_custom_call.1} parent=31 // pred_region
          %s458 = ssub.s32 256, 256
          %459 = vsyncadd %s447, %s458
          %s460 = smul.addr %s22, 2
          %s461 = smul.addr %s460, 128
          %s462 = scalar_lea.hbm %s4, %s461
          %s463 = sshll.u32 %s450, 4
          %s464 = int_to_ptr.vmem [resolvable:$true] %s463
          %469 = dma.vmem_to_hbm [thread:$0]  %s464, 256, %s462, %s447, 128, 128, 8
        $region44: #{tpu_custom_call.1} parent=31 // pred_fallthru
          _
      $region32: #{tpu_custom_call.1} parent=5 // pred_fallthru
        _
      %p470 = scmp.le.s32.totalorder 2, %s17
      // Predicated region
      $region45: #{tpu_custom_call.1} parent=5 // pred_check
        %p471 = pneg %p470
      $region46: #{tpu_custom_call.1} parent=5 // pred_check_branch
        %473 = sbr.rel (%p471) target = $region48
      $region47: #{tpu_custom_call.1} parent=5 // pred_region
        %s474 = ssub.s32 %s17, 2
        // Predicated region
        $region49: #{tpu_custom_call.1} parent=47 // pred_check
          %p475 = pneg %p114
        $region50: #{tpu_custom_call.1} parent=47 // pred_check_branch
          %477 = sbr.rel (%p475) target = $region52
        $region51: #{tpu_custom_call.1} parent=47 // pred_region
          %p478 = scmp.lt.s32.totalorder %s23, 1
          %s479 = scalar_select %p478, %s23, 1
          %s480 = smul.addr %s479, 2
          %s481 = smul.addr %s480, 8
          %s482 = scalar_lea.vmem %s3, %s481
        $region52: #{tpu_custom_call.1} parent=47 // pred_fallthru
          _
        // Predicated region
        $region53: #{tpu_custom_call.1} parent=47 // pred_check
          %p483 = pneg %p140
        $region54: #{tpu_custom_call.1} parent=47 // pred_check_branch
          %485 = sbr.rel (%p483) target = $region56
        $region55: #{tpu_custom_call.1} parent=47 // pred_region
          %s486 = sand.u32 %s125, 1
          %s487 = scalar_lea.sflag [#allocation4], %s486
          %s488 = sand.u32 %s125, 1
          %s489 = smul.addr %s488, 16
          %s490 = scalar_lea.vmem [#allocation5], %s489
          %491 = dma.done %s487, 256
        $region56: #{tpu_custom_call.1} parent=47 // pred_fallthru
          _
      $region48: #{tpu_custom_call.1} parent=5 // pred_fallthru
        _
    $region6: #{tpu_custom_call.1} parent=1 // loop_footer
      %s21 = sadd.s32 1, %s17
    $region7: #{tpu_custom_call.1} parent=1 // loop_footer_branch
      %16 = sbr.rel target = $region3
    $region8: #{tpu_custom_call.1} parent=1 // loop_exit
      _
    %492 = vsyncpa [#allocation3], 1
    %s493 = scalar_lea.sflag [#allocation3], 1
    %494 = vsyncpa %s493, 1
    %495 = vsyncpa [#allocation4], 1
    %s496 = scalar_lea.sflag [#allocation4], 1
    %497 = vsyncpa %s496, 1

</llo_original>
